<compile_context>
chip_gen: v5e
topology: v5e:2x2
jax: 0.10.0
libtpu: 0.0.40
codegen_flags: <defaults>
</compile_context>

<pallas_src>
import functools

import jax
import jax.numpy as jnp
from jax.experimental import pallas as pl
from jax.experimental.pallas import tpu as pltpu


def _round_up(x, m):
    return (x + m - 1) // m * m


def club_kernel(zc_ref, zd_ref,
                w1_ref, b1_ref, w2m_ref, b2m_ref, w2v_ref, b2v_ref,
                part_ref, *, n_valid, tile_n):
    i = pl.program_id(0)
    zd_dim = zd_ref.shape[-1]

    # Row-validity mask (handles the partial edge block; no wrapper-side pad).
    row = i * tile_n + jax.lax.broadcasted_iota(jnp.int32, (tile_n, 1), 0)
    valid = row < n_valid

    # Mask BEFORE any arithmetic so garbage padding rows stay finite (zero).
    zc = jnp.where(valid, zc_ref[...].astype(jnp.float32), 0.0)   # [tile, zc]
    zd = jnp.where(valid, zd_ref[...].astype(jnp.float32), 0.0)   # [tile, zd]

    # LayerNorm statistics computed ONCE and shared by both heads
    # (the LN affine was folded into w1/b1 at wrapper time).
    mean = jnp.mean(zc, axis=-1, keepdims=True)
    var = jnp.mean((zc - mean) ** 2, axis=-1, keepdims=True)
    xhat = (zc - mean) * jax.lax.rsqrt(var + 1e-5)

    # Fused first Linear (mu-head | logvar-head concatenated) + ReLU.
    # bf16 operands on the MXU, f32 accumulation; Dropout(p=0) is identity.
    h = jnp.dot(xhat.astype(w1_ref.dtype), w1_ref[...],
                preferred_element_type=jnp.float32) + b1_ref[...]
    h = jnp.maximum(h, 0.0)
    hb = h.astype(w2m_ref.dtype)

    # Separate output matmuls (full-height weights with zero blocks) so mu and
    # logvar are produced directly — no sub-128-lane split of a fused result.
    mu = jnp.dot(hb, w2m_ref[...], preferred_element_type=jnp.float32) + b2m_ref[...]
    logvar = jnp.tanh(jnp.dot(hb, w2v_ref[...],
                              preferred_element_type=jnp.float32) + b2v_ref[...])
    inv_var = jnp.exp(-logvar)                         # 1 / exp(logvar), use_tanh=True

    # Zero out padded rows' contributions (all values are finite by construction).
    iv = inv_var * valid.astype(jnp.float32)

    # Per-tile partial statistics (all [1, zd], f32):
    s1 = jnp.sum(zd, axis=0, keepdims=True)            # SUM zd       (masked rows are 0)
    s2 = jnp.sum(zd * zd, axis=0, keepdims=True)       # SUM zd^2
    a = jnp.sum(iv, axis=0, keepdims=True)             # SUM iv
    b = jnp.sum(iv * mu, axis=0, keepdims=True)        # SUM iv*mu
    c = jnp.sum(iv * mu * mu, axis=0, keepdims=True)   # SUM iv*mu^2
    p = jnp.sum(iv * (mu - zd) ** 2, axis=0, keepdims=True)  # SUM iv*(mu-zd)^2

    zz = jnp.zeros((2, zd_dim), jnp.float32)
    part_ref[0] = jnp.concatenate([s1, s2, a, b, c, p, zz], axis=0)   # [8, zd]


def make_club_params(key, zc_dim, zd_dim, dtype=jnp.float32):
    """Per-head raw parameters (Linear weights stored [in, out])."""
    def ff_params(k):
        k1, k2 = jax.random.split(k)
        ln_w = jnp.ones((zc_dim,), dtype)
        ln_b = jnp.zeros((zc_dim,), dtype)
        w1 = jax.random.normal(k1, (zc_dim, zc_dim), dtype) * 0.1
        b1 = jnp.zeros((zc_dim,), dtype)
        w2 = jax.random.normal(k2, (zc_dim, zd_dim), dtype) * 0.1
        b2 = jnp.zeros((zd_dim,), dtype)
        return (ln_w, ln_b, w1, b1, w2, b2)

    k_mu, k_lv = jax.random.split(key)
    return ff_params(k_mu), ff_params(k_lv)


def fuse_club_params(params_mu, params_lv, matmul_dtype=jnp.bfloat16):
    """Fold the LayerNorm affine into the first Linear and fuse both heads."""
    def fold(p):
        ln_w, ln_b, w1, b1, w2, b2 = p
        w1f = ln_w[:, None] * w1                       # diag(ln_w) @ W1
        b1f = ln_b[None, :] @ w1 + b1[None, :]         # ln_b @ W1 + b1
        return w1f, b1f, w2, b2[None, :]

    w1m, b1m, w2m, b2m = fold(params_mu)
    w1v, b1v, w2v, b2v = fold(params_lv)
    hid, _ = w2m.shape
    zero = jnp.zeros_like(w2m)

    w1_cat = jnp.concatenate([w1m, w1v], axis=1)       # [zc, 2*hid]
    b1_cat = jnp.concatenate([b1m, b1v], axis=1)       # [1, 2*hid]
    # Full-height output weights with a zero block: both heads consume the full
    # fused h without slicing it.  Free MXU filler at small hid; for hid >= 128
    # split h at a 128-lane boundary instead.
    w2_mu = jnp.concatenate([w2m, zero], axis=0)       # [2*hid, zd]
    w2_lv = jnp.concatenate([zero, w2v], axis=0)       # [2*hid, zd]

    return (w1_cat.astype(matmul_dtype), b1_cat.astype(jnp.float32),
            w2_mu.astype(matmul_dtype), b2m.astype(jnp.float32),
            w2_lv.astype(matmul_dtype), b2v.astype(jnp.float32))


def club_forward(z_c, z_d, fused_params, *, tile_n=1024):
    """Returns (mi, 0.0, 0.0), matching CLUB.forward."""
    N, zc_dim = z_c.shape
    _, zd_dim = z_d.shape
    w1_cat, b1_cat, w2_mu, b2_mu, w2_lv, b2_lv = fused_params

    # Sample-dimension tiling.  Single block == N when it fits; otherwise
    # multiple-of-8 tiles with an in-kernel-masked partial edge block.
    tile = N if N <= tile_n else _round_up(tile_n, 8)
    grid = pl.cdiv(N, tile)

    kernel = functools.partial(club_kernel, n_valid=N, tile_n=tile)

    # NOTE: at production zc_dim, the resident bf16 weights are still
    # double-buffered by default; consider pipeline_mode=pl.Buffered(1) on the
    # weight BlockSpecs and an explicit vmem_limit_bytes for v7x's 64 MiB VMEM.
    parts = pl.pallas_call(
        kernel,
        out_shape=jax.ShapeDtypeStruct((grid, 8, zd_dim), jnp.float32),
        grid=(grid,),
        in_specs=[
            pl.BlockSpec((tile, zc_dim), lambda i: (i, 0)),   # z_c tile (streamed)
            pl.BlockSpec((tile, zd_dim), lambda i: (i, 0)),   # z_d tile (streamed)
            pl.BlockSpec(w1_cat.shape, lambda i: (0, 0)),     # fused W1 (resident)
            pl.BlockSpec(b1_cat.shape, lambda i: (0, 0)),
            pl.BlockSpec(w2_mu.shape, lambda i: (0, 0)),      # mu head W2 (resident)
            pl.BlockSpec(b2_mu.shape, lambda i: (0, 0)),
            pl.BlockSpec(w2_lv.shape, lambda i: (0, 0)),      # logvar head W2 (resident)
            pl.BlockSpec(b2_lv.shape, lambda i: (0, 0)),
        ],
        out_specs=pl.BlockSpec((1, 8, zd_dim), lambda i: (i, 0, 0)),
        compiler_params=pltpu.CompilerParams(
            # Each tile writes its own partial-sum block -> shardable across
            # the two TensorCores on v7x; neutral on v5e/v6e.
            dimension_semantics=("parallel",),
        ),
    )(z_c, z_d, w1_cat, b1_cat, w2_mu, b2_mu, w2_lv, b2_lv)

    # O(num_tiles) final combine in JAX.
    stats = jnp.sum(parts.astype(jnp.float32), axis=0)        # [8, zd]
    s1, s2, a, b, c, p = (stats[k] for k in range(6))
    inv_n = 1.0 / N
    ezd = s1 * inv_n                                           # E[zd]
    ezd2 = s2 * inv_n                                          # E[zd^2]
    neg = jnp.sum(a * ezd2 - 2.0 * b * ezd + c)
    mi = -0.5 * inv_n * (jnp.sum(p) - neg)
    return mi, 0.0, 0.0


def club_reference(z_c, z_d, params_mu, params_lv):
    """Pure-JAX f32 reference faithful to the PyTorch module (for checking)."""
    def ff(x, p):
        ln_w, ln_b, w1, b1, w2, b2 = p
        mean = jnp.mean(x, axis=-1, keepdims=True)
        var = jnp.mean((x - mean) ** 2, axis=-1, keepdims=True)
        h = (x - mean) * jax.lax.rsqrt(var + 1e-5) * ln_w + ln_b
        h = jnp.maximum(h @ w1 + b1, 0.0)
        return h @ w2 + b2

    mu = ff(z_c, params_mu)
    logvar = jnp.tanh(ff(z_c, params_lv))
    inv = jnp.exp(-logvar)
    positive = -(mu - z_d) ** 2 * 0.5 * inv
    diff = z_d[None, :, :] - mu[:, None, :]
    negative = -jnp.mean(diff ** 2, axis=1) * 0.5 * inv
    return jnp.mean(positive.sum(-1) - negative.sum(-1))


if __name__ == "__main__":
    N, zc_dim, zd_dim = 20, 32, 16   # N=20 with tile_n=8 exercises grid + masked partial block

    key = jax.random.PRNGKey(0)
    k_zc, k_zd, k_p = jax.random.split(key, 3)
    z_c = jax.random.normal(k_zc, (N, zc_dim), jnp.float32)
    z_d = jax.random.normal(k_zd, (N, zd_dim), jnp.float32)

    params_mu, params_lv = make_club_params(k_p, zc_dim, zd_dim)
    fused = fuse_club_params(params_mu, params_lv)

    mi_ref = float(club_reference(z_c, z_d, params_mu, params_lv))

    # Multi-tile path with a partial (in-kernel-masked) edge block: 20 = 2*8 + 4.
    mi_small, _, _ = club_forward(z_c, z_d, fused, tile_n=8)
    # Default large-tile path (single block covering all rows).
    mi_big, _, _ = club_forward(z_c, z_d, fused)
    jax.block_until_ready((mi_small, mi_big))

    # Loose tolerance: bf16 MXU operands with f32 accumulation.
    for name, val in (("tile8", float(mi_small)), ("default", float(mi_big))):
        if abs(val - mi_ref) > 1e-1 + 5e-2 * abs(mi_ref):
            raise AssertionError(f"{name} mismatch: kernel={val} ref={mi_ref}")

    print("KERNEL_OK")
</pallas_src>

<mosaic_0001>
module attributes {stable_mosaic.version = 11 : i64} {
  func.func @club_kernel(%arg0: i32, %arg1: memref<8x32xf32, #tpu.memory_space<vmem>>, %arg2: memref<8x16xf32, #tpu.memory_space<vmem>>, %arg3: memref<32x64xbf16, #tpu.memory_space<vmem>>, %arg4: memref<1x64xf32, #tpu.memory_space<vmem>>, %arg5: memref<64x16xbf16, #tpu.memory_space<vmem>>, %arg6: memref<1x16xf32, #tpu.memory_space<vmem>>, %arg7: memref<64x16xbf16, #tpu.memory_space<vmem>>, %arg8: memref<1x16xf32, #tpu.memory_space<vmem>>, %arg9: memref<1x8x16xf32, #tpu.memory_space<vmem>>) attributes {dimension_semantics = [#tpu.dimension_semantics<parallel>], iteration_bounds = array<i64: 3>, scalar_prefetch = 0 : i64, scratch_operands = 0 : i64, tpu.core_type = #tpu.core_type<tc>, window_params = [{transform_indices = @transform_0, window_bounds = array<i64: 8, 32>}, {transform_indices = @transform_1, window_bounds = array<i64: 8, 16>}, {pipeline_mode = #tpu.pipeline_mode<synchronous>, transform_indices = @transform_2, window_bounds = array<i64: 32, 64>}, {pipeline_mode = #tpu.pipeline_mode<synchronous>, transform_indices = @transform_3, window_bounds = array<i64: 1, 64>}, {pipeline_mode = #tpu.pipeline_mode<synchronous>, transform_indices = @transform_4, window_bounds = array<i64: 64, 16>}, {pipeline_mode = #tpu.pipeline_mode<synchronous>, transform_indices = @transform_5, window_bounds = array<i64: 1, 16>}, {pipeline_mode = #tpu.pipeline_mode<synchronous>, transform_indices = @transform_6, window_bounds = array<i64: 64, 16>}, {pipeline_mode = #tpu.pipeline_mode<synchronous>, transform_indices = @transform_7, window_bounds = array<i64: 1, 16>}, {transform_indices = @transform_8, window_bounds = array<i64: 1, 8, 16>}]} {
    %c8_i32 = arith.constant 8 : i32
    %0 = arith.muli %arg0, %c8_i32 : i32
    %1 = tpu.iota {dimensions = array<i32: 0>} : vector<8x1xi32>
    %2 = vector.broadcast %0 : i32 to vector<8x1xi32>
    %3 = arith.addi %2, %1 : vector<8x1xi32>
    %c20_i32 = arith.constant 20 : i32
    %4 = vector.broadcast %c20_i32 : i32 to vector<8x1xi32>
    %5 = arith.cmpi slt, %3, %4 : vector<8x1xi32>
    %c0 = arith.constant 0 : index
    %c0_0 = arith.constant 0 : index
    %6 = vector.load %arg1[%c0, %c0_0] : memref<8x32xf32, #tpu.memory_space<vmem>>, vector<8x32xf32>
    %cst = arith.constant 0.000000e+00 : f32
    %7 = vector.shape_cast %5 : vector<8x1xi1> to vector<8x1xi1>
    %8 = vector.broadcast %7 : vector<8x1xi1> to vector<8x32xi1>
    %9 = vector.broadcast %cst : f32 to vector<8x32xf32>
    %10 = arith.select %8, %6, %9 : vector<8x32xi1>, vector<8x32xf32>
    %c0_1 = arith.constant 0 : index
    %c0_2 = arith.constant 0 : index
    %11 = vector.load %arg2[%c0_1, %c0_2] : memref<8x16xf32, #tpu.memory_space<vmem>>, vector<8x16xf32>
    %cst_3 = arith.constant 0.000000e+00 : f32
    %12 = vector.shape_cast %5 : vector<8x1xi1> to vector<8x1xi1>
    %13 = vector.broadcast %12 : vector<8x1xi1> to vector<8x16xi1>
    %14 = vector.broadcast %cst_3 : f32 to vector<8x16xf32>
    %15 = arith.select %13, %11, %14 : vector<8x16xi1>, vector<8x16xf32>
    %cst_4 = arith.constant dense<0.000000e+00> : vector<8xf32>
    %16 = vector.multi_reduction <add>, %10, %cst_4 [1] : vector<8x32xf32> to vector<8xf32>
    %17 = vector.shape_cast %16 : vector<8xf32> to vector<8x1xf32>
    %cst_5 = arith.constant 3.200000e+01 : f32
    %18 = vector.broadcast %cst_5 : f32 to vector<8x1xf32>
    %19 = arith.divf %17, %18 : vector<8x1xf32>
    %20 = vector.broadcast %19 : vector<8x1xf32> to vector<8x32xf32>
    %21 = arith.subf %10, %20 : vector<8x32xf32>
    %22 = arith.mulf %21, %21 : vector<8x32xf32>
    %cst_6 = arith.constant dense<0.000000e+00> : vector<8xf32>
    %23 = vector.multi_reduction <add>, %22, %cst_6 [1] : vector<8x32xf32> to vector<8xf32>
    %24 = vector.shape_cast %23 : vector<8xf32> to vector<8x1xf32>
    %cst_7 = arith.constant 3.200000e+01 : f32
    %25 = vector.broadcast %cst_7 : f32 to vector<8x1xf32>
    %26 = arith.divf %24, %25 : vector<8x1xf32>
    %27 = vector.broadcast %19 : vector<8x1xf32> to vector<8x32xf32>
    %28 = arith.subf %10, %27 : vector<8x32xf32>
    %cst_8 = arith.constant 9.99999974E-6 : f32
    %29 = vector.broadcast %cst_8 : f32 to vector<8x1xf32>
    %30 = arith.addf %26, %29 : vector<8x1xf32>
    %31 = math.rsqrt %30 : vector<8x1xf32>
    %32 = vector.broadcast %31 : vector<8x1xf32> to vector<8x32xf32>
    %33 = arith.mulf %28, %32 : vector<8x32xf32>
    %34 = arith.truncf %33 : vector<8x32xf32> to vector<8x32xbf16>
    %c0_9 = arith.constant 0 : index
    %c0_10 = arith.constant 0 : index
    %35 = vector.load %arg3[%c0_9, %c0_10] : memref<32x64xbf16, #tpu.memory_space<vmem>>, vector<32x64xbf16>
    %cst_11 = arith.constant dense<0.000000e+00> : vector<8x64xf32>
    %36 = tpu.matmul %34, %35, %cst_11 {dimension_numbers = #tpu.dot_dimension_numbers<[1], [0], [0], [1], [0, 0, 1, 1], [], []>} : vector<8x32xbf16>, vector<32x64xbf16>, vector<8x64xf32> -> vector<8x64xf32>
    %c0_12 = arith.constant 0 : index
    %c0_13 = arith.constant 0 : index
    %37 = vector.load %arg4[%c0_12, %c0_13] : memref<1x64xf32, #tpu.memory_space<vmem>>, vector<1x64xf32>
    %38 = vector.broadcast %37 : vector<1x64xf32> to vector<8x64xf32>
    %39 = arith.addf %36, %38 : vector<8x64xf32>
    %cst_14 = arith.constant 0.000000e+00 : f32
    %40 = vector.broadcast %cst_14 : f32 to vector<8x64xf32>
    %41 = arith.maximumf %39, %40 : vector<8x64xf32>
    %42 = arith.truncf %41 : vector<8x64xf32> to vector<8x64xbf16>
    %c0_15 = arith.constant 0 : index
    %c0_16 = arith.constant 0 : index
    %43 = vector.load %arg5[%c0_15, %c0_16] : memref<64x16xbf16, #tpu.memory_space<vmem>>, vector<64x16xbf16>
    %cst_17 = arith.constant dense<0.000000e+00> : vector<8x16xf32>
    %44 = tpu.matmul %42, %43, %cst_17 {dimension_numbers = #tpu.dot_dimension_numbers<[1], [0], [0], [1], [0, 0, 1, 1], [], []>} : vector<8x64xbf16>, vector<64x16xbf16>, vector<8x16xf32> -> vector<8x16xf32>
    %c0_18 = arith.constant 0 : index
    %c0_19 = arith.constant 0 : index
    %45 = vector.load %arg6[%c0_18, %c0_19] : memref<1x16xf32, #tpu.memory_space<vmem>>, vector<1x16xf32>
    %46 = vector.broadcast %45 : vector<1x16xf32> to vector<8x16xf32>
    %47 = arith.addf %44, %46 : vector<8x16xf32>
    %c0_20 = arith.constant 0 : index
    %c0_21 = arith.constant 0 : index
    %48 = vector.load %arg7[%c0_20, %c0_21] : memref<64x16xbf16, #tpu.memory_space<vmem>>, vector<64x16xbf16>
    %cst_22 = arith.constant dense<0.000000e+00> : vector<8x16xf32>
    %49 = tpu.matmul %42, %48, %cst_22 {dimension_numbers = #tpu.dot_dimension_numbers<[1], [0], [0], [1], [0, 0, 1, 1], [], []>} : vector<8x64xbf16>, vector<64x16xbf16>, vector<8x16xf32> -> vector<8x16xf32>
    %c0_23 = arith.constant 0 : index
    %c0_24 = arith.constant 0 : index
    %50 = vector.load %arg8[%c0_23, %c0_24] : memref<1x16xf32, #tpu.memory_space<vmem>>, vector<1x16xf32>
    %51 = vector.broadcast %50 : vector<1x16xf32> to vector<8x16xf32>
    %52 = arith.addf %49, %51 : vector<8x16xf32>
    %53 = math.tanh %52 : vector<8x16xf32>
    %cst_25 = arith.constant 0.000000e+00 : f32
    %54 = vector.broadcast %cst_25 : f32 to vector<8x16xf32>
    %55 = arith.subf %54, %53 : vector<8x16xf32>
    %56 = math.exp %55 : vector<8x16xf32>
    %57 = arith.extui %5 : vector<8x1xi1> to vector<8x1xi32>
    %58 = arith.sitofp %57 : vector<8x1xi32> to vector<8x1xf32>
    %59 = vector.broadcast %58 : vector<8x1xf32> to vector<8x16xf32>
    %60 = arith.mulf %56, %59 : vector<8x16xf32>
    %cst_26 = arith.constant dense<0.000000e+00> : vector<16xf32>
    %61 = vector.multi_reduction <add>, %15, %cst_26 [0] : vector<8x16xf32> to vector<16xf32>
    %62 = vector.shape_cast %61 : vector<16xf32> to vector<1x16xf32>
    %63 = arith.mulf %15, %15 : vector<8x16xf32>
    %cst_27 = arith.constant dense<0.000000e+00> : vector<16xf32>
    %64 = vector.multi_reduction <add>, %63, %cst_27 [0] : vector<8x16xf32> to vector<16xf32>
    %65 = vector.shape_cast %64 : vector<16xf32> to vector<1x16xf32>
    %cst_28 = arith.constant dense<0.000000e+00> : vector<16xf32>
    %66 = vector.multi_reduction <add>, %60, %cst_28 [0] : vector<8x16xf32> to vector<16xf32>
    %67 = vector.shape_cast %66 : vector<16xf32> to vector<1x16xf32>
    %68 = arith.mulf %60, %47 : vector<8x16xf32>
    %cst_29 = arith.constant dense<0.000000e+00> : vector<16xf32>
    %69 = vector.multi_reduction <add>, %68, %cst_29 [0] : vector<8x16xf32> to vector<16xf32>
    %70 = vector.shape_cast %69 : vector<16xf32> to vector<1x16xf32>
    %71 = arith.mulf %60, %47 : vector<8x16xf32>
    %72 = arith.mulf %71, %47 : vector<8x16xf32>
    %cst_30 = arith.constant dense<0.000000e+00> : vector<16xf32>
    %73 = vector.multi_reduction <add>, %72, %cst_30 [0] : vector<8x16xf32> to vector<16xf32>
    %74 = vector.shape_cast %73 : vector<16xf32> to vector<1x16xf32>
    %75 = arith.subf %47, %15 : vector<8x16xf32>
    %76 = arith.mulf %75, %75 : vector<8x16xf32>
    %77 = arith.mulf %60, %76 : vector<8x16xf32>
    %cst_31 = arith.constant dense<0.000000e+00> : vector<16xf32>
    %78 = vector.multi_reduction <add>, %77, %cst_31 [0] : vector<8x16xf32> to vector<16xf32>
    %79 = vector.shape_cast %78 : vector<16xf32> to vector<1x16xf32>
    %cst_32 = arith.constant 0.000000e+00 : f32
    %80 = vector.broadcast %cst_32 : f32 to vector<2x16xf32>
    %81 = tpu.concatenate %62, %65, %67, %70, %74, %79, %80 in 0 : vector<1x16xf32>, vector<1x16xf32>, vector<1x16xf32>, vector<1x16xf32>, vector<1x16xf32>, vector<1x16xf32>, vector<2x16xf32> -> vector<8x16xf32>
    %c0_33 = arith.constant 0 : index
    %c0_34 = arith.constant 0 : index
    %c0_35 = arith.constant 0 : index
    %82 = vector.load %arg9[%c0_33, %c0_34, %c0_35] : memref<1x8x16xf32, #tpu.memory_space<vmem>>, vector<1x8x16xf32>
    %83 = vector.shape_cast %82 : vector<1x8x16xf32> to vector<8x16xf32>
    %84 = vector.shape_cast %81 : vector<8x16xf32> to vector<1x8x16xf32>
    tpu.vector_store %arg9[%c0_33, %c0_34, %c0_35], %84 {strides = array<i32>} : memref<1x8x16xf32, #tpu.memory_space<vmem>>, vector<1x8x16xf32>,
    return
  }
  func.func @transform_0(%arg0: i32) -> (i32, i32) {
    %c0_i32 = arith.constant 0 : i32
    %c0_i32_0 = arith.constant 0 : i32
    return %arg0, %c0_i32 : i32, i32
  }
  func.func @transform_1(%arg0: i32) -> (i32, i32) {
    %c0_i32 = arith.constant 0 : i32
    %c0_i32_0 = arith.constant 0 : i32
    return %arg0, %c0_i32 : i32, i32
  }
  func.func @transform_2(%arg0: i32) -> (i32, i32) {
    %c0_i32 = arith.constant 0 : i32
    %c0_i32_0 = arith.constant 0 : i32
    %c0_i32_1 = arith.constant 0 : i32
    return %c0_i32, %c0_i32_0 : i32, i32
  }
  func.func @transform_3(%arg0: i32) -> (i32, i32) {
    %c0_i32 = arith.constant 0 : i32
    %c0_i32_0 = arith.constant 0 : i32
    %c0_i32_1 = arith.constant 0 : i32
    return %c0_i32, %c0_i32_0 : i32, i32
  }
  func.func @transform_4(%arg0: i32) -> (i32, i32) {
    %c0_i32 = arith.constant 0 : i32
    %c0_i32_0 = arith.constant 0 : i32
    %c0_i32_1 = arith.constant 0 : i32
    return %c0_i32, %c0_i32_0 : i32, i32
  }
  func.func @transform_5(%arg0: i32) -> (i32, i32) {
    %c0_i32 = arith.constant 0 : i32
    %c0_i32_0 = arith.constant 0 : i32
    %c0_i32_1 = arith.constant 0 : i32
    return %c0_i32, %c0_i32_0 : i32, i32
  }
  func.func @transform_6(%arg0: i32) -> (i32, i32) {
    %c0_i32 = arith.constant 0 : i32
    %c0_i32_0 = arith.constant 0 : i32
    %c0_i32_1 = arith.constant 0 : i32
    return %c0_i32, %c0_i32_0 : i32, i32
  }
  func.func @transform_7(%arg0: i32) -> (i32, i32) {
    %c0_i32 = arith.constant 0 : i32
    %c0_i32_0 = arith.constant 0 : i32
    %c0_i32_1 = arith.constant 0 : i32
    return %c0_i32, %c0_i32_0 : i32, i32
  }
  func.func @transform_8(%arg0: i32) -> (i32, i32, i32) {
    %c0_i32 = arith.constant 0 : i32
    %c0_i32_0 = arith.constant 0 : i32
    %c0_i32_1 = arith.constant 0 : i32
    return %arg0, %c0_i32, %c0_i32_0 : i32, i32, i32
  }
}

</mosaic_0001>

<llo_original>
// kernel: tpu_custom_call.1
$region0: #{tpu_custom_call.1}
  #allocation0 [shape = 'u32[]', space=smem, size = 0x4, offset = 0x4, fixed_abs, tag = 'smem constant byte address 0x4 - core index']
  #allocation1 [shape = 'u32[72,128]{1,0:T(1,128)}', space=vmem, size = 0x9000, scoped, tag = 'internal scratch']
  %s0 = inlined_call_operand.vmem [shape: f32[20,32], index: 0, kind: input, shape index: {}]
  %s1 = inlined_call_operand.vmem [shape: f32[20,16], index: 1, kind: input, shape index: {}]
  %s2 = inlined_call_operand.vmem [shape: bf16[32,64], index: 2, kind: input, shape index: {}]
  %s3 = inlined_call_operand.vmem [shape: f32[1,64], index: 3, kind: input, shape index: {}]
  %s4 = inlined_call_operand.vmem [shape: bf16[64,16], index: 4, kind: input, shape index: {}]
  %s5 = inlined_call_operand.vmem [shape: f32[1,16], index: 5, kind: input, shape index: {}]
  %s6 = inlined_call_operand.vmem [shape: bf16[64,16], index: 6, kind: input, shape index: {}]
  %s7 = inlined_call_operand.vmem [shape: f32[1,16], index: 7, kind: input, shape index: {}]
  %s8 = inlined_call_operand.hbm [shape: f32[3,8,16], index: 8, kind: output, shape index: {}]
  %s9 = sld [smem:[#allocation0]]
  $region65: #{tpu_custom_call.1} parent=0
    _
  %s11 = ssub.s32 1, %s9
  %s12 = scalar_select 0, %s11, %s9
  $region1: #{tpu_custom_call.1} parent=0
    #allocation2 [shape = 'u8[8192]{0}', space=vmem, size = 0x2000, scoped, tag = 'output window, operand 0']
    #allocation3 [shape = 's32[2]{0}', space=sflag, size = 0x8, scoped, tag = 'scoped memory for tpu_custom_call.1']
    %13 = vsyncpa [#allocation3], 0
    %s14 = scalar_lea.sflag [#allocation3], 1
    %15 = vsyncpa %s14, 0
    loop: start=0, step=1, limit=5
    $region2: #{tpu_custom_call.1} parent=1 // loop_pre_header
      _
    $region3: #{tpu_custom_call.1} parent=1 // loop_header
      %s17 = sphi 0, %s21
      %p18 = scmp.ge.s32.totalorder %s17, 5
      %s27 = sphi 0, %s29
      %s30 = sphi 0, %s27
      %s31 = sphi 0, %s30
      %s47 = sphi 0, %s31
      %s53 = sphi 0, %s55
      %s56 = sphi 0, %s53
      %s57 = sphi 0, %s56
      %s73 = sphi 0, %s57
      %s77 = sphi 0, %s77
      %s79 = sphi 0, %s77
      %s80 = sphi 0, %s79
      %s94 = sphi 0, %s80
      %s98 = sphi 0, %s98
      %s100 = sphi 0, %s98
      %s101 = sphi 0, %s100
      %s115 = sphi 0, %s101
      %s119 = sphi 0, %s119
      %s121 = sphi 0, %s119
      %s122 = sphi 0, %s121
      %s136 = sphi 0, %s122
      %s140 = sphi 0, %s140
      %s142 = sphi 0, %s140
      %s143 = sphi 0, %s142
      %s157 = sphi 0, %s143
      %s161 = sphi 0, %s161
      %s163 = sphi 0, %s161
      %s164 = sphi 0, %s163
      %s178 = sphi 0, %s164
      %s182 = sphi 0, %s182
      %s184 = sphi 0, %s182
      %s185 = sphi 0, %s184
      %s199 = sphi 0, %s185
      %s205 = sphi 0, %s207
      %s208 = sphi 0, %s205
      %s209 = sphi 0, %s208
      %s225 = sphi 0, %s209
    $region4: #{tpu_custom_call.1} parent=1 // loop_header_branch
      %20 = sbr.rel (%p18) target = $region8
    $region5: #{tpu_custom_call.1} parent=1 // loop_body
      %s22 = ssub.s32 %s17, 1
      %s23 = ssub.s32 %s17, 2
      %s24 = sadd.s32 %s17, 1
      %s25 = ssub.s32 %s17, %s24
      %p26 = scmp.eq.s32.totalorder %s25, 0
      %s28 = sadd.s32 %s27, 1
      %s29 = scalar_select %p26, %s27, %s28
      %p32 = pneg %p26
      %p33 = scmp.eq.s32.totalorder %s17, 2
      %p34 = por %p32, %p33
      %p35 = scmp.ne.s32.totalorder %s27, %s30
      %p36 = scmp.eq.s32.totalorder %s17, 0
      %p37 = por %p35, %p36
      %p38 = scmp.ne.s32.totalorder %s27, %s30
      %p39 = scmp.eq.s32.totalorder %s22, 2
      %p40 = por %p38, %p39
      %p41 = scmp.ne.s32.totalorder %s30, %s31
      %p42 = scmp.eq.s32.totalorder %s22, 0
      %p43 = por %p41, %p42
      %p44 = scmp.ne.s32.totalorder %s30, %s31
      %p45 = scmp.eq.s32.totalorder %s23, 2
      %p46 = por %p44, %p45
      %p48 = scmp.ne.s32.totalorder %s31, %s47
      %p49 = scmp.eq.s32.totalorder %s23, 0
      %p50 = por %p48, %p49
      %s51 = ssub.s32 %s17, %s24
      %p52 = scmp.eq.s32.totalorder %s51, 0
      %s54 = sadd.s32 %s53, 1
      %s55 = scalar_select %p52, %s53, %s54
      %p58 = pneg %p52
      %p59 = scmp.eq.s32.totalorder %s17, 2
      %p60 = por %p58, %p59
      %p61 = scmp.ne.s32.totalorder %s53, %s56
      %p62 = scmp.eq.s32.totalorder %s17, 0
      %p63 = por %p61, %p62
      %p64 = scmp.ne.s32.totalorder %s53, %s56
      %p65 = scmp.eq.s32.totalorder %s22, 2
      %p66 = por %p64, %p65
      %p67 = scmp.ne.s32.totalorder %s56, %s57
      %p68 = scmp.eq.s32.totalorder %s22, 0
      %p69 = por %p67, %p68
      %p70 = scmp.ne.s32.totalorder %s56, %s57
      %p71 = scmp.eq.s32.totalorder %s23, 2
      %p72 = por %p70, %p71
      %p74 = scmp.ne.s32.totalorder %s57, %s73
      %p75 = scmp.eq.s32.totalorder %s23, 0
      %p76 = por %p74, %p75
      %s78 = sadd.s32 %s77, 1
      %p81 = scmp.eq.s32.totalorder %s17, 2
      %p82 = scmp.ne.s32.totalorder %s77, %s79
      %p83 = scmp.eq.s32.totalorder %s17, 0
      %p84 = por %p82, %p83
      %p85 = scmp.ne.s32.totalorder %s77, %s79
      %p86 = scmp.eq.s32.totalorder %s22, 2
      %p87 = por %p85, %p86
      %p88 = scmp.ne.s32.totalorder %s79, %s80
      %p89 = scmp.eq.s32.totalorder %s22, 0
      %p90 = por %p88, %p89
      %p91 = scmp.ne.s32.totalorder %s79, %s80
      %p92 = scmp.eq.s32.totalorder %s23, 2
      %p93 = por %p91, %p92
      %p95 = scmp.ne.s32.totalorder %s80, %s94
      %p96 = scmp.eq.s32.totalorder %s23, 0
      %p97 = por %p95, %p96
      %s99 = sadd.s32 %s98, 1
      %p102 = scmp.eq.s32.totalorder %s17, 2
      %p103 = scmp.ne.s32.totalorder %s98, %s100
      %p104 = scmp.eq.s32.totalorder %s17, 0
      %p105 = por %p103, %p104
      %p106 = scmp.ne.s32.totalorder %s98, %s100
      %p107 = scmp.eq.s32.totalorder %s22, 2
      %p108 = por %p106, %p107
      %p109 = scmp.ne.s32.totalorder %s100, %s101
      %p110 = scmp.eq.s32.totalorder %s22, 0
      %p111 = por %p109, %p110
      %p112 = scmp.ne.s32.totalorder %s100, %s101
      %p113 = scmp.eq.s32.totalorder %s23, 2
      %p114 = por %p112, %p113
      %p116 = scmp.ne.s32.totalorder %s101, %s115
      %p117 = scmp.eq.s32.totalorder %s23, 0
      %p118 = por %p116, %p117
      %s120 = sadd.s32 %s119, 1
      %p123 = scmp.eq.s32.totalorder %s17, 2
      %p124 = scmp.ne.s32.totalorder %s119, %s121
      %p125 = scmp.eq.s32.totalorder %s17, 0
      %p126 = por %p124, %p125
      %p127 = scmp.ne.s32.totalorder %s119, %s121
      %p128 = scmp.eq.s32.totalorder %s22, 2
      %p129 = por %p127, %p128
      %p130 = scmp.ne.s32.totalorder %s121, %s122
      %p131 = scmp.eq.s32.totalorder %s22, 0
      %p132 = por %p130, %p131
      %p133 = scmp.ne.s32.totalorder %s121, %s122
      %p134 = scmp.eq.s32.totalorder %s23, 2
      %p135 = por %p133, %p134
      %p137 = scmp.ne.s32.totalorder %s122, %s136
      %p138 = scmp.eq.s32.totalorder %s23, 0
      %p139 = por %p137, %p138
      %s141 = sadd.s32 %s140, 1
      %p144 = scmp.eq.s32.totalorder %s17, 2
      %p145 = scmp.ne.s32.totalorder %s140, %s142
      %p146 = scmp.eq.s32.totalorder %s17, 0
      %p147 = por %p145, %p146
      %p148 = scmp.ne.s32.totalorder %s140, %s142
      %p149 = scmp.eq.s32.totalorder %s22, 2
      %p150 = por %p148, %p149
      %p151 = scmp.ne.s32.totalorder %s142, %s143
      %p152 = scmp.eq.s32.totalorder %s22, 0
      %p153 = por %p151, %p152
      %p154 = scmp.ne.s32.totalorder %s142, %s143
      %p155 = scmp.eq.s32.totalorder %s23, 2
      %p156 = por %p154, %p155
      %p158 = scmp.ne.s32.totalorder %s143, %s157
      %p159 = scmp.eq.s32.totalorder %s23, 0
      %p160 = por %p158, %p159
      %s162 = sadd.s32 %s161, 1
      %p165 = scmp.eq.s32.totalorder %s17, 2
      %p166 = scmp.ne.s32.totalorder %s161, %s163
      %p167 = scmp.eq.s32.totalorder %s17, 0
      %p168 = por %p166, %p167
      %p169 = scmp.ne.s32.totalorder %s161, %s163
      %p170 = scmp.eq.s32.totalorder %s22, 2
      %p171 = por %p169, %p170
      %p172 = scmp.ne.s32.totalorder %s163, %s164
      %p173 = scmp.eq.s32.totalorder %s22, 0
      %p174 = por %p172, %p173
      %p175 = scmp.ne.s32.totalorder %s163, %s164
      %p176 = scmp.eq.s32.totalorder %s23, 2
      %p177 = por %p175, %p176
      %p179 = scmp.ne.s32.totalorder %s164, %s178
      %p180 = scmp.eq.s32.totalorder %s23, 0
      %p181 = por %p179, %p180
      %s183 = sadd.s32 %s182, 1
      %p186 = scmp.eq.s32.totalorder %s17, 2
      %p187 = scmp.ne.s32.totalorder %s182, %s184
      %p188 = scmp.eq.s32.totalorder %s17, 0
      %p189 = por %p187, %p188
      %p190 = scmp.ne.s32.totalorder %s182, %s184
      %p191 = scmp.eq.s32.totalorder %s22, 2
      %p192 = por %p190, %p191
      %p193 = scmp.ne.s32.totalorder %s184, %s185
      %p194 = scmp.eq.s32.totalorder %s22, 0
      %p195 = por %p193, %p194
      %p196 = scmp.ne.s32.totalorder %s184, %s185
      %p197 = scmp.eq.s32.totalorder %s23, 2
      %p198 = por %p196, %p197
      %p200 = scmp.ne.s32.totalorder %s185, %s199
      %p201 = scmp.eq.s32.totalorder %s23, 0
      %p202 = por %p200, %p201
      %s203 = ssub.s32 %s17, %s24
      %p204 = scmp.eq.s32.totalorder %s203, 0
      %s206 = sadd.s32 %s205, 1
      %s207 = scalar_select %p204, %s205, %s206
      %p210 = pneg %p204
      %p211 = scmp.eq.s32.totalorder %s17, 2
      %p212 = por %p210, %p211
      %p213 = scmp.ne.s32.totalorder %s205, %s208
      %p214 = scmp.eq.s32.totalorder %s17, 0
      %p215 = por %p213, %p214
      %p216 = scmp.ne.s32.totalorder %s205, %s208
      %p217 = scmp.eq.s32.totalorder %s22, 2
      %p218 = por %p216, %p217
      %p219 = scmp.ne.s32.totalorder %s208, %s209
      %p220 = scmp.eq.s32.totalorder %s22, 0
      %p221 = por %p219, %p220
      %p222 = scmp.ne.s32.totalorder %s208, %s209
      %p223 = scmp.eq.s32.totalorder %s23, 2
      %p224 = por %p222, %p223
      %p226 = scmp.ne.s32.totalorder %s209, %s225
      %p227 = scmp.eq.s32.totalorder %s23, 0
      %p228 = por %p226, %p227
      %p229 = scmp.le.s32.totalorder 1, %s17
      %p230 = scmp.lt.s32.totalorder %s17, 4
      %p231 = pnand %p229, %p230
      %p232 = pneg %p231
      // Predicated region
      $region9: #{tpu_custom_call.1} parent=5 // pred_check
        _
      $region10: #{tpu_custom_call.1} parent=5 // pred_check_branch
        %234 = sbr.rel (%p231) target = $region12
      $region11: #{tpu_custom_call.1} parent=5 // pred_region
        %s235 = ssub.s32 %s17, 1
        // Predicated region
        $region13: #{tpu_custom_call.1} parent=11 // pred_check
          %p236 = pneg %p90
        $region14: #{tpu_custom_call.1} parent=11 // pred_check_branch
          %238 = sbr.rel (%p236) target = $region16
        $region15: #{tpu_custom_call.1} parent=11 // pred_region
          _
        $region16: #{tpu_custom_call.1} parent=11 // pred_fallthru
          _
        // Predicated region
        $region17: #{tpu_custom_call.1} parent=11 // pred_check
          %p239 = pneg %p111
        $region18: #{tpu_custom_call.1} parent=11 // pred_check_branch
          %241 = sbr.rel (%p239) target = $region20
        $region19: #{tpu_custom_call.1} parent=11 // pred_region
          _
        $region20: #{tpu_custom_call.1} parent=11 // pred_fallthru
          _
        // Predicated region
        $region21: #{tpu_custom_call.1} parent=11 // pred_check
          %p242 = pneg %p132
        $region22: #{tpu_custom_call.1} parent=11 // pred_check_branch
          %244 = sbr.rel (%p242) target = $region24
        $region23: #{tpu_custom_call.1} parent=11 // pred_region
          _
        $region24: #{tpu_custom_call.1} parent=11 // pred_fallthru
          _
        // Predicated region
        $region25: #{tpu_custom_call.1} parent=11 // pred_check
          %p245 = pneg %p153
        $region26: #{tpu_custom_call.1} parent=11 // pred_check_branch
          %247 = sbr.rel (%p245) target = $region28
        $region27: #{tpu_custom_call.1} parent=11 // pred_region
          _
        $region28: #{tpu_custom_call.1} parent=11 // pred_fallthru
          _
        // Predicated region
        $region29: #{tpu_custom_call.1} parent=11 // pred_check
          %p248 = pneg %p174
        $region30: #{tpu_custom_call.1} parent=11 // pred_check_branch
          %250 = sbr.rel (%p248) target = $region32
        $region31: #{tpu_custom_call.1} parent=11 // pred_region
          _
        $region32: #{tpu_custom_call.1} parent=11 // pred_fallthru
          _
        // Predicated region
        $region33: #{tpu_custom_call.1} parent=11 // pred_check
          %p251 = pneg %p195
        $region34: #{tpu_custom_call.1} parent=11 // pred_check_branch
          %253 = sbr.rel (%p251) target = $region36
        $region35: #{tpu_custom_call.1} parent=11 // pred_region
          _
        $region36: #{tpu_custom_call.1} parent=11 // pred_fallthru
          _
      $region12: #{tpu_custom_call.1} parent=5 // pred_fallthru
        _
      %p254 = scmp.lt.s32.totalorder %s17, 3
      // Predicated region
      $region37: #{tpu_custom_call.1} parent=5 // pred_check
        %p255 = pneg %p254
      $region38: #{tpu_custom_call.1} parent=5 // pred_check_branch
        %257 = sbr.rel (%p255) target = $region40
      $region39: #{tpu_custom_call.1} parent=5 // pred_region
        // Predicated region
        $region41: #{tpu_custom_call.1} parent=39 // pred_check
          %p258 = pneg %p37
        $region42: #{tpu_custom_call.1} parent=39 // pred_check_branch
          %260 = sbr.rel (%p258) target = $region44
        $region43: #{tpu_custom_call.1} parent=39 // pred_region
          %p261 = scmp.lt.s32.totalorder %s17, 2
          %s262 = scalar_select %p261, %s17, 2
          %s263 = smul.addr %s262, 8
          %s264 = scalar_lea.vmem %s0, %s263
        $region44: #{tpu_custom_call.1} parent=39 // pred_fallthru
          _
        // Predicated region
        $region45: #{tpu_custom_call.1} parent=39 // pred_check
          %p265 = pneg %p63
        $region46: #{tpu_custom_call.1} parent=39 // pred_check_branch
          %267 = sbr.rel (%p265) target = $region48
        $region47: #{tpu_custom_call.1} parent=39 // pred_region
          %p268 = scmp.lt.s32.totalorder %s17, 2
          %s269 = scalar_select %p268, %s17, 2
          %s270 = smul.addr %s269, 8
          %s271 = scalar_lea.vmem %s1, %s270
        $region48: #{tpu_custom_call.1} parent=39 // pred_fallthru
          _
      $region40: #{tpu_custom_call.1} parent=5 // pred_fallthru
        _
      %p272 = scmp.le.s32.totalorder 1, %s17
      %p273 = scmp.lt.s32.totalorder %s17, 4
      %p274 = pnand %p272, %p273
      %p275 = pneg %p274
      // Predicated region
      $region49: #{tpu_custom_call.1} parent=5 // pred_check
        _
      $region50: #{tpu_custom_call.1} parent=5 // pred_check_branch
        %277 = sbr.rel (%p274) target = $region52
      $region51: #{tpu_custom_call.1} parent=5 // pred_region
        %s278 = ssub.s32 %s17, 1
        %p279 = scmp.lt.s32.totalorder %s22, 2
        %s280 = scalar_select %p279, %s22, 2
        %s281 = smul.addr %s280, 8
        %s282 = scalar_lea.vmem %s0, %s281
        %p283 = pneg %p43
        %p284 = pneg %p40
        %p285 = scmp.lt.s32.totalorder %s22, 2
        %s286 = scalar_select %p285, %s22, 2
        %s287 = smul.addr %s286, 8
        %s288 = scalar_lea.vmem %s1, %s287
        %p289 = pneg %p69
        %p290 = pneg %p66
        %p291 = pneg %p90
        %p292 = pneg %p87
        %p293 = pneg %p111
        %p294 = pneg %p108
        %p295 = pneg %p132
        %p296 = pneg %p129
        %p297 = pneg %p153
        %p298 = pneg %p150
        %p299 = pneg %p174
        %p300 = pneg %p171
        %p301 = pneg %p195
        %p302 = pneg %p192
        %p303 = pneg %p221
        %p304 = pneg %p218
        %s305 = sand.u32 %s208, 1
        %s306 = scalar_lea.sflag [#allocation3], %s305
        %s307 = sand.u32 %s208, 1
        %s308 = smul.addr %s307, 8
        %s309 = scalar_lea.vmem [#allocation2], %s308
        %p310 = scmp.lt.s32.totalorder %s22, 2
        %s311 = scalar_select %p310, %s22, 2
        %s312 = smul.addr %s311, 8
        %s313 = scalar_lea.vmem %s0, %s312
        %p314 = scmp.lt.s32.totalorder %s22, 2
        %s315 = scalar_select %p314, %s22, 2
        %s316 = smul.addr %s315, 8
        %s317 = scalar_lea.vmem %s1, %s316
        %s319 = smul.u32 %s22, 8
        %v320 = vlaneseq
        %v321 = vshrl.u32 %v320, 7
        %v322 = vstv %s319
        %v323 = vadd.s32 %v322, %v321
        %vm324 = vcmp.lt.s32.totalorder %v323, 20
        %v325 = vld [vmem:[%s313] sm:$0xff]
        %v326 = vsel %vm324, 1, 0
        %vm327 = vcmp.eq.s32.totalorder %v326, 1
        %v328 = vsel %vm327, %v325, 0.0
        %v329 = vld [vmem:[%s317] sm:$0xff]
        %v330 = vsel %vm327, %v329, 0.0
        %vm331 = vcmask 261120
        %v332 = vsel %vm331, %v328, 0.0
        %333 = vadd.xlane.f32.xlu0 %v332
        %v334 = vpop.xlane.xlu0 %333
        %v335 = vrcp.pop 32.0
        %v336 = vmul.f32 32.0, %v335
        %v337 = vsub.f32 1.0, %v336
        %v338 = vmul.f32 %v335, %v337
        %v339 = vadd.f32 %v335, %v338
        %vm340 = vweird.f32 %v335
        %v341 = vsel %vm340, %v335, %v339
        %v342 = vmul.f32 %v334, %v341
        %v343 = vsub.f32 %v328, %v342
        %v344 = vmul.f32 %v343, %v343
        %v345 = vsel %vm331, %v344, 0.0
        %346 = vadd.xlane.f32.xlu0 %v345
        %v347 = vpop.xlane.xlu0 %346
        %v348 = vmul.f32 %v347, %v341
        %v349 = vadd.f32 %v348, 1e-05
        %v350 = vrsqrt.pop %v349
        %v351 = vmul.f32 %v350, %v349
        %v352 = vmul.f32 %v351, %v350
        %v353 = vmul.f32 0.5, %v352
        %v354 = vsub.f32 1.5, %v353
        %v355 = vmul.f32 %v350, %v354
        %vm356 = vweird.f32 %v349
        %vm357 = vweird.f32 %v350
        %vm358 = vmor %vm356, %vm357
        %v359 = vsel %vm358, %v350, %v355
        %v360 = vmul.f32 %v343, %v359
        %v361 = vpack.c.bf16 %v360, %v360
        %v362 = vld [vmem:[%s2] sm:$0xf]
        %v363 = vld [vmem:[%s2 + $0x4] sm:$0xf]
        %v364 = vld [vmem:[%s2 + $0x8] sm:$0xf]
        %v365 = vld [vmem:[%s2 + $0xc] sm:$0xf]
        %v366 = vld [vmem:[%s3] sm:$0x1]
        %v368 = vperm.slane %v366, 0
        %v374 = vunpack.c.l.b16 %v362
        %v375 = vunpack.c.l.b16 %v363
        %v376 = vunpack.c.l.b16 %v364
        %v377 = vunpack.c.l.b16 %v365
        %v378 = vpack.c.b16 %v375, %v374
        %v379 = vpack.c.b16 %v377, %v376
        %v383 = vsel %vm331, %v361, 0
        %385 = vmatpush.bf16.msra.mxu0 0
        %386 = vmatpush.bf16.msra.mxu0 0
        %387 = vmatpush.bf16.msra.mxu0 0
        %388 = vmatpush.bf16.msra.mxu0 0
        %389 = vmatpush.bf16.msra.mxu0 0
        %390 = vmatpush.bf16.msra.mxu0 0
        %391 = vmatpush.bf16.msra.mxu0 %v379
        %392 = vmatpush.bf16.msra.mxu0 %v378
        %393 = vmatmul.bf16.gmra.mxu0 %v383
        %v394 = vpop.f32.mrf.mxu0
        %v395 = vadd.f32 %v368, %v394
        %v396 = vpop.f32.mrf.mxu0
        %397 = vdwg.mxu0
        %v398 = vmax.f32 %v395, 0.0
        %v399 = vpack.c.bf16 %v398, %v398
        %v400 = vld [vmem:[%s4] sm:$0xf]
        %v401 = vld [vmem:[%s4 + $0x4] sm:$0xf]
        %v402 = vld [vmem:[%s4 + $0x8] sm:$0xf]
        %v403 = vld [vmem:[%s4 + $0xc] sm:$0xf]
        %v404 = vld [vmem:[%s4 + $0x10] sm:$0xf]
        %v405 = vld [vmem:[%s4 + $0x14] sm:$0xf]
        %v406 = vld [vmem:[%s4 + $0x18] sm:$0xf]
        %v407 = vld [vmem:[%s4 + $0x1c] sm:$0xf]
        %v408 = vld [vmem:[%s5] sm:$0x1]
        %v410 = vperm.slane %v408, 0
        %v420 = vunpack.c.l.b16 %v400
        %v421 = vunpack.c.l.b16 %v401
        %v422 = vunpack.c.l.b16 %v402
        %v423 = vunpack.c.l.b16 %v403
        %v424 = vunpack.c.l.b16 %v404
        %v425 = vunpack.c.l.b16 %v405
        %v426 = vunpack.c.l.b16 %v406
        %v427 = vunpack.c.l.b16 %v407
        %v428 = vpack.c.b16 %v421, %v420
        %v429 = vpack.c.b16 %v423, %v422
        %v430 = vpack.c.b16 %v425, %v424
        %v431 = vpack.c.b16 %v427, %v426
        %vm436 = vcmask 523264
        %v438 = vsel %vm436, %v399, 0
        %440 = vmatpush.bf16.msra.mxu0 0
        %441 = vmatpush.bf16.msra.mxu0 0
        %442 = vmatpush.bf16.msra.mxu0 0
        %443 = vmatpush.bf16.msra.mxu0 0
        %444 = vmatpush.bf16.msra.mxu0 %v431
        %445 = vmatpush.bf16.msra.mxu0 %v430
        %446 = vmatpush.bf16.msra.mxu0 %v429
        %447 = vmatpush.bf16.msra.mxu0 %v428
        %448 = vmatmul.bf16.gmra.mxu0 %v438
        %v449 = vpop.f32.mrf.mxu0
        %v450 = vadd.f32 %v410, %v449
        %v451 = vpop.f32.mrf.mxu0
        %452 = vdwg.mxu0
        %v453 = vld [vmem:[%s6] sm:$0xf]
        %v454 = vld [vmem:[%s6 + $0x4] sm:$0xf]
        %v455 = vld [vmem:[%s6 + $0x8] sm:$0xf]
        %v456 = vld [vmem:[%s6 + $0xc] sm:$0xf]
        %v457 = vld [vmem:[%s6 + $0x10] sm:$0xf]
        %v458 = vld [vmem:[%s6 + $0x14] sm:$0xf]
        %v459 = vld [vmem:[%s6 + $0x18] sm:$0xf]
        %v460 = vld [vmem:[%s6 + $0x1c] sm:$0xf]
        %v461 = vld [vmem:[%s7] sm:$0x1]
        %v463 = vperm.slane %v461, 0
        %v473 = vunpack.c.l.b16 %v453
        %v474 = vunpack.c.l.b16 %v454
        %v475 = vunpack.c.l.b16 %v455
        %v476 = vunpack.c.l.b16 %v456
        %v477 = vunpack.c.l.b16 %v457
        %v478 = vunpack.c.l.b16 %v458
        %v479 = vunpack.c.l.b16 %v459
        %v480 = vunpack.c.l.b16 %v460
        %v481 = vpack.c.b16 %v474, %v473
        %v482 = vpack.c.b16 %v476, %v475
        %v483 = vpack.c.b16 %v478, %v477
        %v484 = vpack.c.b16 %v480, %v479
        %489 = vmatpush.bf16.msra.mxu0 0
        %490 = vmatpush.bf16.msra.mxu0 0
        %491 = vmatpush.bf16.msra.mxu0 0
        %492 = vmatpush.bf16.msra.mxu0 0
        %493 = vmatpush.bf16.msra.mxu0 %v484
        %494 = vmatpush.bf16.msra.mxu0 %v483
        %495 = vmatpush.bf16.msra.mxu0 %v482
        %496 = vmatpush.bf16.msra.mxu0 %v481
        %497 = vmatmul.bf16.gmra.mxu0 %v438
        %v498 = vpop.f32.mrf.mxu0
        %v499 = vadd.f32 %v463, %v498
        %v500 = vpop.f32.mrf.mxu0
        %501 = vdwg.mxu0
        %v502 = vtanh.pop %v499
        %v503 = vsub.f32 0.0, %v502
        %v504 = vmul.f32 %v503, 1.442695
        %v505 = vpow.pop %v504
        %v506 = vcvt.s32.f32 %v326
        %v507 = vmul.f32 %v505, %v506
        %vm508 = vcmask 130048
        %v509 = vsel %vm508, %v330, 0.0
        %v510 = vrot.slane %v509, 4
        %v511 = vadd.f32 %v509, %v510
        %v512 = vrot.slane %v511, 2
        %v513 = vadd.f32 %v511, %v512
        %v514 = vrot.slane %v513, 1
        %v515 = vadd.f32 %v513, %v514
        %v516 = vmul.f32 %v330, %v330
        %v517 = vsel %vm508, %v516, 0.0
        %v518 = vrot.slane %v517, 4
        %v519 = vadd.f32 %v517, %v518
        %v520 = vrot.slane %v519, 2
        %v521 = vadd.f32 %v519, %v520
        %v522 = vrot.slane %v521, 1
        %v523 = vadd.f32 %v521, %v522
        %v524 = vsel %vm508, %v507, 0.0
        %v525 = vrot.slane %v524, 4
        %v526 = vadd.f32 %v524, %v525
        %v527 = vrot.slane %v526, 2
        %v528 = vadd.f32 %v526, %v527
        %v529 = vrot.slane %v528, 1
        %v530 = vadd.f32 %v528, %v529
        %v531 = vmul.f32 %v507, %v450
        %v532 = vsel %vm508, %v531, 0.0
        %v533 = vrot.slane %v532, 4
        %v534 = vadd.f32 %v532, %v533
        %v535 = vrot.slane %v534, 2
        %v536 = vadd.f32 %v534, %v535
        %v537 = vrot.slane %v536, 1
        %v538 = vadd.f32 %v536, %v537
        %v539 = vmul.f32 %v531, %v450
        %v540 = vsel %vm508, %v539, 0.0
        %v541 = vrot.slane %v540, 4
        %v542 = vadd.f32 %v540, %v541
        %v543 = vrot.slane %v542, 2
        %v544 = vadd.f32 %v542, %v543
        %v545 = vrot.slane %v544, 1
        %v546 = vadd.f32 %v544, %v545
        %v547 = vsub.f32 %v450, %v330
        %v548 = vmul.f32 %v547, %v547
        %v549 = vmul.f32 %v507, %v548
        %v550 = vsel %vm508, %v549, 0.0
        %v551 = vrot.slane %v550, 4
        %v552 = vadd.f32 %v550, %v551
        %v553 = vrot.slane %v552, 2
        %v554 = vadd.f32 %v552, %v553
        %v555 = vrot.slane %v554, 1
        %v556 = vadd.f32 %v554, %v555
        %vm557 = vcmask 1040384
        %v558 = vsel %vm557, %v515, %v523
        %vm559 = vcmask 1041408
        %v560 = vsel %vm559, %v558, %v530
        %vm561 = vcmask 1042432
        %v562 = vsel %vm561, %v560, %v538
        %vm563 = vcmask 1043456
        %v564 = vsel %vm563, %v562, %v546
        %vm565 = vcmask 1044480
        %v566 = vsel %vm565, %v564, %v556
        %vm567 = vcmask 1045504
        %v568 = vsel %vm567, %v566, 0.0
        %569 = vst.msk [vmem:[%s309] sm:$0xff] %vm508, %v568
        %s570 = sand.u32 %s208, 1
        %s571 = scalar_lea.sflag [#allocation3], %s570
        %s572 = sand.u32 %s208, 1
        %s573 = smul.addr %s572, 8
        %s574 = scalar_lea.vmem [#allocation2], %s573
        // Predicated region
        $region53: #{tpu_custom_call.1} parent=51 // pred_check
          %p575 = pneg %p218
        $region54: #{tpu_custom_call.1} parent=51 // pred_check_branch
          %577 = sbr.rel (%p575) target = $region56
        $region55: #{tpu_custom_call.1} parent=51 // pred_region
          %579 = vsyncadd %s571, 0
          %s580 = smul.addr %s22, 8
          %s581 = scalar_lea.hbm %s8, %s580
          %s583 = sshll.u32 %s574, 4
          %s584 = int_to_ptr.vmem [resolvable:$true] %s583
          %s585 = sshll.u32 %s581, 4
          %s586 = int_to_ptr.hbm [resolvable:$true] %s585
          %588 = dma.vmem_to_hbm [thread:$0]  %s584, 128, %s586, %s571
        $region56: #{tpu_custom_call.1} parent=51 // pred_fallthru
          _
      $region52: #{tpu_custom_call.1} parent=5 // pred_fallthru
        _
      %p589 = scmp.le.s32.totalorder 2, %s17
      // Predicated region
      $region57: #{tpu_custom_call.1} parent=5 // pred_check
        %p590 = pneg %p589
      $region58: #{tpu_custom_call.1} parent=5 // pred_check_branch
        %592 = sbr.rel (%p590) target = $region60
      $region59: #{tpu_custom_call.1} parent=5 // pred_region
        %s593 = ssub.s32 %s17, 2
        // Predicated region
        $region61: #{tpu_custom_call.1} parent=59 // pred_check
          %p594 = pneg %p224
        $region62: #{tpu_custom_call.1} parent=59 // pred_check_branch
          %596 = sbr.rel (%p594) target = $region64
        $region63: #{tpu_custom_call.1} parent=59 // pred_region
          %s597 = sand.u32 %s209, 1
          %s598 = scalar_lea.sflag [#allocation3], %s597
          %s599 = sand.u32 %s209, 1
          %s600 = smul.addr %s599, 8
          %s601 = scalar_lea.vmem [#allocation2], %s600
          %603 = dma.done %s598, 128
        $region64: #{tpu_custom_call.1} parent=59 // pred_fallthru
          _
      $region60: #{tpu_custom_call.1} parent=5 // pred_fallthru
        _
    $region6: #{tpu_custom_call.1} parent=1 // loop_footer
      %s21 = sadd.s32 1, %s17
    $region7: #{tpu_custom_call.1} parent=1 // loop_footer_branch
      %16 = sbr.rel target = $region3
    $region8: #{tpu_custom_call.1} parent=1 // loop_exit
      _
    %604 = vsyncpa [#allocation3], 1
    %s605 = scalar_lea.sflag [#allocation3], 1
    %606 = vsyncpa %s605, 1

</llo_original>
